<compile_context>
chip_gen: v5e
topology: v5e:2x2
jax: 0.10.0
libtpu: 0.0.40
codegen_flags: <defaults>
</compile_context>

<pallas_src>
import functools

import jax
import jax.numpy as jnp
from jax.experimental import pallas as pl
from jax.experimental.pallas import tpu as pltpu


def _aggregator_kernel(*refs, dropout_p):
    """Grid = (M//tm, K//tk).  acc_ref is a (tm, N) f32 accumulator."""
    if dropout_p > 0.0:
        a_ref, e_ref, bits_ref, o_ref, acc_ref = refs
    else:
        a_ref, e_ref, o_ref, acc_ref = refs
        bits_ref = None

    k = pl.program_id(1)

    @pl.when(k == 0)
    def _():
        acc_ref[...] = jnp.zeros_like(acc_ref)

    acc_ref[...] += jnp.dot(
        a_ref[...], e_ref[...], preferred_element_type=jnp.float32
    )

    @pl.when(k == pl.num_programs(1) - 1)
    def _():
        out = acc_ref[...]
        if dropout_p > 0.0:
            # keep iff bits >= p * 2^32  (P[keep] = 1 - p), inverted dropout.
            threshold = jnp.uint32(min(int(dropout_p * (2.0 ** 32)), 2 ** 32 - 1))
            keep = bits_ref[...] >= threshold
            scale = jnp.float32(1.0 / (1.0 - dropout_p))
            out = jnp.where(keep, out * scale, jnp.float32(0.0))
        o_ref[...] = out.astype(o_ref.dtype)


def aggregator_forward(ego_embeddings, A_in, *, dropout_p=0.1, seed=0,
                       tm=512, tk=512, compute_dtype=jnp.bfloat16):
    """Pallas implementation of Aggregator.forward (train-mode dropout)."""
    M, K = A_in.shape
    K2, N = ego_embeddings.shape
    assert K == K2
    assert 0.0 <= dropout_p < 1.0, "dropout_p must be in [0, 1)"

    tm = min(tm, M)
    tk = min(tk, K)
    assert M % tm == 0 and K % tk == 0
    assert (tm % 8 == 0) or tm == M
    assert (tk % 128 == 0) or tk == K

    out_dtype = ego_embeddings.dtype
    a = A_in.astype(compute_dtype)
    e = ego_embeddings.astype(compute_dtype)

    grid = (M // tm, K // tk)
    in_specs = [
        pl.BlockSpec((tm, tk), lambda i, k: (i, k)),   # A_in row-block, K-block
        pl.BlockSpec((tk, N), lambda i, k: (k, 0)),    # ego K-block, full dim
    ]
    inputs = [a, e]

    if dropout_p > 0.0:
        bits = jax.random.bits(jax.random.PRNGKey(seed), (M, N), dtype=jnp.uint32)
        # Constant block index across k -> DMA'd once per output row-block.
        in_specs.append(pl.BlockSpec((tm, N), lambda i, k: (i, 0)))
        inputs.append(bits)

    itemsize = jnp.dtype(compute_dtype).itemsize
    bytes_accessed = (M * K * itemsize + K * N * itemsize
                      + M * N * jnp.dtype(out_dtype).itemsize)
    if dropout_p > 0.0:
        bytes_accessed += M * N * 4

    kernel = functools.partial(_aggregator_kernel, dropout_p=float(dropout_p))

    return pl.pallas_call(
        kernel,
        out_shape=jax.ShapeDtypeStruct((M, N), out_dtype),
        grid_spec=pltpu.PrefetchScalarGridSpec(
            num_scalar_prefetch=0,
            grid=grid,
            in_specs=in_specs,
            out_specs=pl.BlockSpec((tm, N), lambda i, k: (i, 0)),
            scratch_shapes=[pltpu.VMEM((tm, N), jnp.float32)],
        ),
        compiler_params=pltpu.CompilerParams(
            dimension_semantics=("parallel", "arbitrary"),
            vmem_limit_bytes=32 * 1024 * 1024,  # safe on v5e/v6e/v7x
        ),
        cost_estimate=pl.CostEstimate(
            flops=2 * M * K * N,
            transcendentals=0,
            bytes_accessed=bytes_accessed,
        ),
    )(*inputs)


if __name__ == "__main__":
    # Small synthetic shapes: n_users + n_entities = 256 nodes, dim = 128.
    n_nodes, dim = 256, 128
    dropout_p = 0.1

    key = jax.random.PRNGKey(0)
    k1, k2 = jax.random.split(key)
    ego = jax.random.normal(k1, (n_nodes, dim), dtype=jnp.float32)
    # Dense stand-in for the sparse normalized adjacency A_in.
    A_in = jax.random.uniform(k2, (n_nodes, n_nodes), dtype=jnp.float32) * 0.01

    # 1) Matmul-path correctness (dropout off, f32 compute -> tight tolerance).
    out_nodrop = jax.block_until_ready(
        aggregator_forward(ego, A_in, dropout_p=0.0, compute_dtype=jnp.float32))
    ref = A_in @ ego
    assert jnp.allclose(out_nodrop, ref, atol=1e-3, rtol=1e-3), "matmul mismatch"

    # 2) Full forward: bf16 inputs + fused train-mode inverted dropout.
    out = jax.block_until_ready(
        aggregator_forward(ego, A_in, dropout_p=dropout_p, seed=1234))
    assert out.shape == (n_nodes, dim)
    assert bool(jnp.all(jnp.isfinite(out)))

    # ~10% of elements should be dropped.
    zero_frac = float(jnp.mean(out == 0.0))
    assert 0.05 < zero_frac < 0.15, f"unexpected dropout rate {zero_frac}"

    # Surviving elements match the matmul scaled by 1/(1-p) (bf16 tolerance).
    ref_scaled = ref / (1.0 - dropout_p)
    ok = jnp.where(out != 0.0,
                   jnp.isclose(out, ref_scaled, rtol=1e-1, atol=2e-2), True)
    assert bool(jnp.all(ok)), "dropout-scaled values mismatch"

    print("KERNEL_OK")
</pallas_src>

<mosaic_0001>
module attributes {stable_mosaic.version = 11 : i64} {
  func.func @_aggregator_kernel(%arg0: i32, %arg1: i32, %arg2: memref<256x256xf32, #tpu.memory_space<vmem>>, %arg3: memref<256x128xf32, #tpu.memory_space<vmem>>, %arg4: memref<256x128xf32, #tpu.memory_space<vmem>>, %arg5: memref<256x128xf32, #tpu.memory_space<vmem>>) attributes {dimension_semantics = [#tpu.dimension_semantics<parallel>, #tpu.dimension_semantics<arbitrary>], iteration_bounds = array<i64: 1, 1>, scalar_prefetch = 0 : i64, scratch_operands = 1 : i64, tpu.core_type = #tpu.core_type<tc>, window_params = [{transform_indices = @transform_0, window_bounds = array<i64: 256, 256>}, {transform_indices = @transform_1, window_bounds = array<i64: 256, 128>}, {transform_indices = @transform_2, window_bounds = array<i64: 256, 128>}]} {
    %c0_i32 = arith.constant 0 : i32
    %0 = arith.cmpi eq, %arg1, %c0_i32 : i32
    %1 = arith.extui %0 : i1 to i32
    %c0_i32_0 = arith.constant 0 : i32
    %2 = arith.cmpi ne, %1, %c0_i32_0 : i32
    scf.if %2 {
      %cst_10 = arith.constant 0.000000e+00 : f32
      %12 = vector.broadcast %cst_10 : f32 to vector<256x128xf32>
      %c0_11 = arith.constant 0 : index
      %c0_12 = arith.constant 0 : index
      %13 = vector.load %arg5[%c0_11, %c0_12] : memref<256x128xf32, #tpu.memory_space<vmem>>, vector<256x128xf32>
      tpu.vector_store %arg5[%c0_11, %c0_12], %12 {strides = array<i32>} : memref<256x128xf32, #tpu.memory_space<vmem>>, vector<256x128xf32>,
    } else {
    }
    %c0 = arith.constant 0 : index
    %c0_1 = arith.constant 0 : index
    %3 = vector.load %arg5[%c0, %c0_1] : memref<256x128xf32, #tpu.memory_space<vmem>>, vector<256x128xf32>
    %c0_2 = arith.constant 0 : index
    %c0_3 = arith.constant 0 : index
    %4 = vector.load %arg2[%c0_2, %c0_3] : memref<256x256xf32, #tpu.memory_space<vmem>>, vector<256x256xf32>
    %c0_4 = arith.constant 0 : index
    %c0_5 = arith.constant 0 : index
    %5 = vector.load %arg3[%c0_4, %c0_5] : memref<256x128xf32, #tpu.memory_space<vmem>>, vector<256x128xf32>
    %cst = arith.constant dense<0.000000e+00> : vector<256x128xf32>
    %6 = tpu.matmul %4, %5, %cst {dimension_numbers = #tpu.dot_dimension_numbers<[1], [0], [0], [1], [0, 0, 1, 1], [], []>} : vector<256x256xf32>, vector<256x128xf32>, vector<256x128xf32> -> vector<256x128xf32>
    %7 = arith.addf %3, %6 : vector<256x128xf32>
    %c0_6 = arith.constant 0 : index
    %c0_7 = arith.constant 0 : index
    %8 = vector.load %arg5[%c0_6, %c0_7] : memref<256x128xf32, #tpu.memory_space<vmem>>, vector<256x128xf32>
    tpu.vector_store %arg5[%c0_6, %c0_7], %7 {strides = array<i32>} : memref<256x128xf32, #tpu.memory_space<vmem>>, vector<256x128xf32>,
    %c0_i32_8 = arith.constant 0 : i32
    %9 = arith.cmpi eq, %arg1, %c0_i32_8 : i32
    %10 = arith.extui %9 : i1 to i32
    %c0_i32_9 = arith.constant 0 : i32
    %11 = arith.cmpi ne, %10, %c0_i32_9 : i32
    scf.if %11 {
      %c0_10 = arith.constant 0 : index
      %c0_11 = arith.constant 0 : index
      %12 = vector.load %arg5[%c0_10, %c0_11] : memref<256x128xf32, #tpu.memory_space<vmem>>, vector<256x128xf32>
      %c0_12 = arith.constant 0 : index
      %c0_13 = arith.constant 0 : index
      %13 = vector.load %arg4[%c0_12, %c0_13] : memref<256x128xf32, #tpu.memory_space<vmem>>, vector<256x128xf32>
      tpu.vector_store %arg4[%c0_12, %c0_13], %12 {strides = array<i32>} : memref<256x128xf32, #tpu.memory_space<vmem>>, vector<256x128xf32>,
    } else {
    }
    return
  }
  func.func @transform_0(%arg0: i32, %arg1: i32) -> (i32, i32) {
    %c0_i32 = arith.constant 0 : i32
    return %arg0, %arg1 : i32, i32
  }
  func.func @transform_1(%arg0: i32, %arg1: i32) -> (i32, i32) {
    %c0_i32 = arith.constant 0 : i32
    %c0_i32_0 = arith.constant 0 : i32
    return %arg1, %c0_i32 : i32, i32
  }
  func.func @transform_2(%arg0: i32, %arg1: i32) -> (i32, i32) {
    %c0_i32 = arith.constant 0 : i32
    %c0_i32_0 = arith.constant 0 : i32
    return %arg0, %c0_i32 : i32, i32
  }
}

</mosaic_0001>

<llo_original>
// kernel: tpu_custom_call.1
$region0: #{tpu_custom_call.1}
  #allocation0 [shape = 'u32[]', space=smem, size = 0x4, offset = 0x4, fixed_abs, tag = 'smem constant byte address 0x4 - core index']
  #allocation1 [shape = 'u32[72,128]{1,0:T(1,128)}', space=vmem, size = 0x9000, scoped, tag = 'internal scratch']
  #allocation2 [shape = 'f32[256,128]{1,0:T(8,128)}', space=vmem, size = 0x20000, scoped, tag = 'scratch operand']
  %s0 = inlined_call_operand.hbm [shape: f32[256,256], index: 0, kind: input, shape index: {}]
  %s1 = inlined_call_operand.hbm [shape: f32[256,128], index: 1, kind: input, shape index: {}]
  %s2 = inlined_call_operand.hbm [shape: f32[256,128], index: 2, kind: output, shape index: {}]
  %s3 = sld [smem:[#allocation0]]
  $region34: #{tpu_custom_call.1} parent=0
    _
  %s5 = ssub.s32 1, %s3
  %s6 = scalar_select 0, %s5, %s3
  $region1: #{tpu_custom_call.1} parent=0
    #allocation3 [shape = 'u8[262144]{0}', space=vmem, size = 0x40000, scoped, tag = 'input window, operand 0, single buffered']
    #allocation4 [shape = 's32[1]{0}', space=sflag, size = 0x4, scoped, tag = 'scoped memory for tpu_custom_call.1']
    #allocation5 [shape = 's32[1]{0}', space=sflag, size = 0x4, scoped, tag = 'scoped memory for tpu_custom_call.1']
    #allocation6 [shape = 'u8[131072]{0}', space=vmem, size = 0x20000, scoped, tag = 'input window, operand 1, single buffered']
    #allocation7 [shape = 's32[1]{0}', space=sflag, size = 0x4, scoped, tag = 'scoped memory for tpu_custom_call.1']
    #allocation8 [shape = 'u8[131072]{0}', space=vmem, size = 0x20000, scoped, tag = 'output window, operand 0, single buffered']
    %7 = vsyncpa [#allocation4], 0
    %8 = vsyncpa [#allocation7], 0
    %9 = vsyncpa [#allocation5], 0
    // Predicated region
    $region2: #{tpu_custom_call.1} parent=1 // pred_check
      _
    $region3: #{tpu_custom_call.1} parent=1 // pred_check_branch
      %11 = sbr.rel (0) target = $region5
    $region4: #{tpu_custom_call.1} parent=1 // pred_region
      %13 = vsyncadd [#allocation4], 0
      %s14 = sshll.u32 %s0, 4
      %s15 = int_to_ptr.hbm [resolvable:$true] %s14
      %s16 = sshll.u32 [#allocation3], 4
      %s17 = int_to_ptr.vmem [resolvable:$true] %s16
      %22 = dma.hbm_to_vmem [thread:$0]  %s15, 8192, %s17, [#allocation4], 256, 256, 16
    $region5: #{tpu_custom_call.1} parent=1 // pred_fallthru
      _
    // Predicated region
    $region6: #{tpu_custom_call.1} parent=1 // pred_check
      _
    $region7: #{tpu_custom_call.1} parent=1 // pred_check_branch
      %24 = sbr.rel (0) target = $region9
    $region8: #{tpu_custom_call.1} parent=1 // pred_region
      %26 = vsyncadd [#allocation7], 0
      %s27 = sshll.u32 %s1, 4
      %s28 = int_to_ptr.hbm [resolvable:$true] %s27
      %s29 = sshll.u32 [#allocation6], 4
      %s30 = int_to_ptr.vmem [resolvable:$true] %s29
      %35 = dma.hbm_to_vmem [thread:$0]  %s28, 4096, %s30, [#allocation7], 128, 128, 8
    $region9: #{tpu_custom_call.1} parent=1 // pred_fallthru
      _
    // Predicated region
    $region10: #{tpu_custom_call.1} parent=1 // pred_check
      _
    $region11: #{tpu_custom_call.1} parent=1 // pred_check_branch
      %37 = sbr.rel (0) target = $region13
    $region12: #{tpu_custom_call.1} parent=1 // pred_region
      %39 = dma.done [#allocation4], 8192
    $region13: #{tpu_custom_call.1} parent=1 // pred_fallthru
      _
    // Predicated region
    $region14: #{tpu_custom_call.1} parent=1 // pred_check
      _
    $region15: #{tpu_custom_call.1} parent=1 // pred_check_branch
      %41 = sbr.rel (0) target = $region17
    $region16: #{tpu_custom_call.1} parent=1 // pred_region
      %43 = dma.done [#allocation7], 4096
    $region17: #{tpu_custom_call.1} parent=1 // pred_fallthru
      _
    %p44 = scmp.eq.s32.totalorder 0, 0
    // Predicated region
    $region18: #{tpu_custom_call.1} parent=1 // pred_check
      %p45 = pneg %p44
    $region19: #{tpu_custom_call.1} parent=1 // pred_check_branch
      %47 = sbr.rel (%p45) target = $region21
    $region20: #{tpu_custom_call.1} parent=1 // pred_region
      %48 = vst [vmem:[#allocation2] sm:$0xff] 0.0
      %49 = vst [vmem:[#allocation2 + $0x8] sm:$0xff] 0.0
      %50 = vst [vmem:[#allocation2 + $0x10] sm:$0xff] 0.0
      %51 = vst [vmem:[#allocation2 + $0x18] sm:$0xff] 0.0
      %52 = vst [vmem:[#allocation2 + $0x20] sm:$0xff] 0.0
      %53 = vst [vmem:[#allocation2 + $0x28] sm:$0xff] 0.0
      %54 = vst [vmem:[#allocation2 + $0x30] sm:$0xff] 0.0
      %55 = vst [vmem:[#allocation2 + $0x38] sm:$0xff] 0.0
      %56 = vst [vmem:[#allocation2 + $0x40] sm:$0xff] 0.0
      %57 = vst [vmem:[#allocation2 + $0x48] sm:$0xff] 0.0
      %58 = vst [vmem:[#allocation2 + $0x50] sm:$0xff] 0.0
      %59 = vst [vmem:[#allocation2 + $0x58] sm:$0xff] 0.0
      %60 = vst [vmem:[#allocation2 + $0x60] sm:$0xff] 0.0
      %61 = vst [vmem:[#allocation2 + $0x68] sm:$0xff] 0.0
      %62 = vst [vmem:[#allocation2 + $0x70] sm:$0xff] 0.0
      %63 = vst [vmem:[#allocation2 + $0x78] sm:$0xff] 0.0
      %64 = vst [vmem:[#allocation2 + $0x80] sm:$0xff] 0.0
      %65 = vst [vmem:[#allocation2 + $0x88] sm:$0xff] 0.0
      %66 = vst [vmem:[#allocation2 + $0x90] sm:$0xff] 0.0
      %67 = vst [vmem:[#allocation2 + $0x98] sm:$0xff] 0.0
      %68 = vst [vmem:[#allocation2 + $0xa0] sm:$0xff] 0.0
      %69 = vst [vmem:[#allocation2 + $0xa8] sm:$0xff] 0.0
      %70 = vst [vmem:[#allocation2 + $0xb0] sm:$0xff] 0.0
      %71 = vst [vmem:[#allocation2 + $0xb8] sm:$0xff] 0.0
      %72 = vst [vmem:[#allocation2 + $0xc0] sm:$0xff] 0.0
      %73 = vst [vmem:[#allocation2 + $0xc8] sm:$0xff] 0.0
      %74 = vst [vmem:[#allocation2 + $0xd0] sm:$0xff] 0.0
      %75 = vst [vmem:[#allocation2 + $0xd8] sm:$0xff] 0.0
      %76 = vst [vmem:[#allocation2 + $0xe0] sm:$0xff] 0.0
      %77 = vst [vmem:[#allocation2 + $0xe8] sm:$0xff] 0.0
      %78 = vst [vmem:[#allocation2 + $0xf0] sm:$0xff] 0.0
      %79 = vst [vmem:[#allocation2 + $0xf8] sm:$0xff] 0.0
    $region21: #{tpu_custom_call.1} parent=1 // pred_fallthru
      _
    %v80 = vld [vmem:[#allocation2] sm:$0xff]
    %v81 = vld [vmem:[#allocation2 + $0x8] sm:$0xff]
    %v82 = vld [vmem:[#allocation2 + $0x10] sm:$0xff]
    %v83 = vld [vmem:[#allocation2 + $0x18] sm:$0xff]
    %v84 = vld [vmem:[#allocation2 + $0x20] sm:$0xff]
    %v85 = vld [vmem:[#allocation2 + $0x28] sm:$0xff]
    %v86 = vld [vmem:[#allocation2 + $0x30] sm:$0xff]
    %v87 = vld [vmem:[#allocation2 + $0x38] sm:$0xff]
    %v88 = vld [vmem:[#allocation2 + $0x40] sm:$0xff]
    %v89 = vld [vmem:[#allocation2 + $0x48] sm:$0xff]
    %v90 = vld [vmem:[#allocation2 + $0x50] sm:$0xff]
    %v91 = vld [vmem:[#allocation2 + $0x58] sm:$0xff]
    %v92 = vld [vmem:[#allocation2 + $0x60] sm:$0xff]
    %v93 = vld [vmem:[#allocation2 + $0x68] sm:$0xff]
    %v94 = vld [vmem:[#allocation2 + $0x70] sm:$0xff]
    %v95 = vld [vmem:[#allocation2 + $0x78] sm:$0xff]
    %v96 = vld [vmem:[#allocation2 + $0x80] sm:$0xff]
    %v97 = vld [vmem:[#allocation2 + $0x88] sm:$0xff]
    %v98 = vld [vmem:[#allocation2 + $0x90] sm:$0xff]
    %v99 = vld [vmem:[#allocation2 + $0x98] sm:$0xff]
    %v100 = vld [vmem:[#allocation2 + $0xa0] sm:$0xff]
    %v101 = vld [vmem:[#allocation2 + $0xa8] sm:$0xff]
    %v102 = vld [vmem:[#allocation2 + $0xb0] sm:$0xff]
    %v103 = vld [vmem:[#allocation2 + $0xb8] sm:$0xff]
    %v104 = vld [vmem:[#allocation2 + $0xc0] sm:$0xff]
    %v105 = vld [vmem:[#allocation2 + $0xc8] sm:$0xff]
    %v106 = vld [vmem:[#allocation2 + $0xd0] sm:$0xff]
    %v107 = vld [vmem:[#allocation2 + $0xd8] sm:$0xff]
    %v108 = vld [vmem:[#allocation2 + $0xe0] sm:$0xff]
    %v109 = vld [vmem:[#allocation2 + $0xe8] sm:$0xff]
    %v110 = vld [vmem:[#allocation2 + $0xf0] sm:$0xff]
    %v111 = vld [vmem:[#allocation2 + $0xf8] sm:$0xff]
    %v112 = vld [vmem:[#allocation3] sm:$0xff]
    %v113 = vld [vmem:[#allocation3 + $0x8] sm:$0xff]
    %v114 = vld [vmem:[#allocation3 + $0x10] sm:$0xff]
    %v115 = vld [vmem:[#allocation3 + $0x18] sm:$0xff]
    %v116 = vld [vmem:[#allocation3 + $0x20] sm:$0xff]
    %v117 = vld [vmem:[#allocation3 + $0x28] sm:$0xff]
    %v118 = vld [vmem:[#allocation3 + $0x30] sm:$0xff]
    %v119 = vld [vmem:[#allocation3 + $0x38] sm:$0xff]
    %v120 = vld [vmem:[#allocation3 + $0x40] sm:$0xff]
    %v121 = vld [vmem:[#allocation3 + $0x48] sm:$0xff]
    %v122 = vld [vmem:[#allocation3 + $0x50] sm:$0xff]
    %v123 = vld [vmem:[#allocation3 + $0x58] sm:$0xff]
    %v124 = vld [vmem:[#allocation3 + $0x60] sm:$0xff]
    %v125 = vld [vmem:[#allocation3 + $0x68] sm:$0xff]
    %v126 = vld [vmem:[#allocation3 + $0x70] sm:$0xff]
    %v127 = vld [vmem:[#allocation3 + $0x78] sm:$0xff]
    %v128 = vld [vmem:[#allocation3 + $0x80] sm:$0xff]
    %v129 = vld [vmem:[#allocation3 + $0x88] sm:$0xff]
    %v130 = vld [vmem:[#allocation3 + $0x90] sm:$0xff]
    %v131 = vld [vmem:[#allocation3 + $0x98] sm:$0xff]
    %v132 = vld [vmem:[#allocation3 + $0xa0] sm:$0xff]
    %v133 = vld [vmem:[#allocation3 + $0xa8] sm:$0xff]
    %v134 = vld [vmem:[#allocation3 + $0xb0] sm:$0xff]
    %v135 = vld [vmem:[#allocation3 + $0xb8] sm:$0xff]
    %v136 = vld [vmem:[#allocation3 + $0xc0] sm:$0xff]
    %v137 = vld [vmem:[#allocation3 + $0xc8] sm:$0xff]
    %v138 = vld [vmem:[#allocation3 + $0xd0] sm:$0xff]
    %v139 = vld [vmem:[#allocation3 + $0xd8] sm:$0xff]
    %v140 = vld [vmem:[#allocation3 + $0xe0] sm:$0xff]
    %v141 = vld [vmem:[#allocation3 + $0xe8] sm:$0xff]
    %v142 = vld [vmem:[#allocation3 + $0xf0] sm:$0xff]
    %v143 = vld [vmem:[#allocation3 + $0xf8] sm:$0xff]
    %v144 = vld [vmem:[#allocation3 + $0x100] sm:$0xff]
    %v145 = vld [vmem:[#allocation3 + $0x108] sm:$0xff]
    %v146 = vld [vmem:[#allocation3 + $0x110] sm:$0xff]
    %v147 = vld [vmem:[#allocation3 + $0x118] sm:$0xff]
    %v148 = vld [vmem:[#allocation3 + $0x120] sm:$0xff]
    %v149 = vld [vmem:[#allocation3 + $0x128] sm:$0xff]
    %v150 = vld [vmem:[#allocation3 + $0x130] sm:$0xff]
    %v151 = vld [vmem:[#allocation3 + $0x138] sm:$0xff]
    %v152 = vld [vmem:[#allocation3 + $0x140] sm:$0xff]
    %v153 = vld [vmem:[#allocation3 + $0x148] sm:$0xff]
    %v154 = vld [vmem:[#allocation3 + $0x150] sm:$0xff]
    %v155 = vld [vmem:[#allocation3 + $0x158] sm:$0xff]
    %v156 = vld [vmem:[#allocation3 + $0x160] sm:$0xff]
    %v157 = vld [vmem:[#allocation3 + $0x168] sm:$0xff]
    %v158 = vld [vmem:[#allocation3 + $0x170] sm:$0xff]
    %v159 = vld [vmem:[#allocation3 + $0x178] sm:$0xff]
    %v160 = vld [vmem:[#allocation3 + $0x180] sm:$0xff]
    %v161 = vld [vmem:[#allocation3 + $0x188] sm:$0xff]
    %v162 = vld [vmem:[#allocation3 + $0x190] sm:$0xff]
    %v163 = vld [vmem:[#allocation3 + $0x198] sm:$0xff]
    %v164 = vld [vmem:[#allocation3 + $0x1a0] sm:$0xff]
    %v165 = vld [vmem:[#allocation3 + $0x1a8] sm:$0xff]
    %v166 = vld [vmem:[#allocation3 + $0x1b0] sm:$0xff]
    %v167 = vld [vmem:[#allocation3 + $0x1b8] sm:$0xff]
    %v168 = vld [vmem:[#allocation3 + $0x1c0] sm:$0xff]
    %v169 = vld [vmem:[#allocation3 + $0x1c8] sm:$0xff]
    %v170 = vld [vmem:[#allocation3 + $0x1d0] sm:$0xff]
    %v171 = vld [vmem:[#allocation3 + $0x1d8] sm:$0xff]
    %v172 = vld [vmem:[#allocation3 + $0x1e0] sm:$0xff]
    %v173 = vld [vmem:[#allocation3 + $0x1e8] sm:$0xff]
    %v174 = vld [vmem:[#allocation3 + $0x1f0] sm:$0xff]
    %v175 = vld [vmem:[#allocation3 + $0x1f8] sm:$0xff]
    %v176 = vld [vmem:[#allocation6] sm:$0xff]
    %v177 = vld [vmem:[#allocation6 + $0x8] sm:$0xff]
    %v178 = vld [vmem:[#allocation6 + $0x10] sm:$0xff]
    %v179 = vld [vmem:[#allocation6 + $0x18] sm:$0xff]
    %v180 = vld [vmem:[#allocation6 + $0x20] sm:$0xff]
    %v181 = vld [vmem:[#allocation6 + $0x28] sm:$0xff]
    %v182 = vld [vmem:[#allocation6 + $0x30] sm:$0xff]
    %v183 = vld [vmem:[#allocation6 + $0x38] sm:$0xff]
    %v184 = vld [vmem:[#allocation6 + $0x40] sm:$0xff]
    %v185 = vld [vmem:[#allocation6 + $0x48] sm:$0xff]
    %v186 = vld [vmem:[#allocation6 + $0x50] sm:$0xff]
    %v187 = vld [vmem:[#allocation6 + $0x58] sm:$0xff]
    %v188 = vld [vmem:[#allocation6 + $0x60] sm:$0xff]
    %v189 = vld [vmem:[#allocation6 + $0x68] sm:$0xff]
    %v190 = vld [vmem:[#allocation6 + $0x70] sm:$0xff]
    %v191 = vld [vmem:[#allocation6 + $0x78] sm:$0xff]
    %v192 = vld [vmem:[#allocation6 + $0x80] sm:$0xff]
    %v193 = vld [vmem:[#allocation6 + $0x88] sm:$0xff]
    %v194 = vld [vmem:[#allocation6 + $0x90] sm:$0xff]
    %v195 = vld [vmem:[#allocation6 + $0x98] sm:$0xff]
    %v196 = vld [vmem:[#allocation6 + $0xa0] sm:$0xff]
    %v197 = vld [vmem:[#allocation6 + $0xa8] sm:$0xff]
    %v198 = vld [vmem:[#allocation6 + $0xb0] sm:$0xff]
    %v199 = vld [vmem:[#allocation6 + $0xb8] sm:$0xff]
    %v200 = vld [vmem:[#allocation6 + $0xc0] sm:$0xff]
    %v201 = vld [vmem:[#allocation6 + $0xc8] sm:$0xff]
    %v202 = vld [vmem:[#allocation6 + $0xd0] sm:$0xff]
    %v203 = vld [vmem:[#allocation6 + $0xd8] sm:$0xff]
    %v204 = vld [vmem:[#allocation6 + $0xe0] sm:$0xff]
    %v205 = vld [vmem:[#allocation6 + $0xe8] sm:$0xff]
    %v206 = vld [vmem:[#allocation6 + $0xf0] sm:$0xff]
    %v207 = vld [vmem:[#allocation6 + $0xf8] sm:$0xff]
    %208 = vmatpush.msra.mxu0 %v191
    %209 = vmatpush.msra.mxu0 %v190
    %210 = vmatpush.msra.mxu0 %v189
    %211 = vmatpush.msra.mxu0 %v188
    %212 = vmatpush.msra.mxu0 %v187
    %213 = vmatpush.msra.mxu0 %v186
    %214 = vmatpush.msra.mxu0 %v185
    %215 = vmatpush.msra.mxu0 %v184
    %216 = vmatpush.msra.mxu0 %v183
    %217 = vmatpush.msra.mxu0 %v182
    %218 = vmatpush.msra.mxu0 %v181
    %219 = vmatpush.msra.mxu0 %v180
    %220 = vmatpush.msra.mxu0 %v179
    %221 = vmatpush.msra.mxu0 %v178
    %222 = vmatpush.msra.mxu0 %v177
    %223 = vmatpush.msra.mxu0 %v176
    %224 = vmatmul.f32.gmra.mxu0 %v112
    %v225 = vpop.f32.mrf.mxu0
    %v226 = vadd.f32 0.0, %v225
    %227 = vmatmul.f32.gmra.mxu0 %v114
    %v228 = vpop.f32.mrf.mxu0
    %v229 = vadd.f32 0.0, %v228
    %230 = vmatmul.f32.gmra.mxu0 %v116
    %v231 = vpop.f32.mrf.mxu0
    %v232 = vadd.f32 0.0, %v231
    %233 = vmatmul.f32.gmra.mxu0 %v118
    %v234 = vpop.f32.mrf.mxu0
    %v235 = vadd.f32 0.0, %v234
    %236 = vmatmul.f32.gmra.mxu0 %v120
    %v237 = vpop.f32.mrf.mxu0
    %v238 = vadd.f32 0.0, %v237
    %239 = vmatmul.f32.gmra.mxu0 %v122
    %v240 = vpop.f32.mrf.mxu0
    %v241 = vadd.f32 0.0, %v240
    %242 = vmatmul.f32.gmra.mxu0 %v124
    %v243 = vpop.f32.mrf.mxu0
    %v244 = vadd.f32 0.0, %v243
    %245 = vmatmul.f32.gmra.mxu0 %v126
    %v246 = vpop.f32.mrf.mxu0
    %v247 = vadd.f32 0.0, %v246
    %248 = vmatmul.f32.gmra.mxu0 %v128
    %v249 = vpop.f32.mrf.mxu0
    %v250 = vadd.f32 0.0, %v249
    %251 = vmatmul.f32.gmra.mxu0 %v130
    %v252 = vpop.f32.mrf.mxu0
    %v253 = vadd.f32 0.0, %v252
    %254 = vmatmul.f32.gmra.mxu0 %v132
    %v255 = vpop.f32.mrf.mxu0
    %v256 = vadd.f32 0.0, %v255
    %257 = vmatmul.f32.gmra.mxu0 %v134
    %v258 = vpop.f32.mrf.mxu0
    %v259 = vadd.f32 0.0, %v258
    %260 = vmatmul.f32.gmra.mxu0 %v136
    %v261 = vpop.f32.mrf.mxu0
    %v262 = vadd.f32 0.0, %v261
    %263 = vmatmul.f32.gmra.mxu0 %v138
    %v264 = vpop.f32.mrf.mxu0
    %v265 = vadd.f32 0.0, %v264
    %266 = vmatmul.f32.gmra.mxu0 %v140
    %v267 = vpop.f32.mrf.mxu0
    %v268 = vadd.f32 0.0, %v267
    %269 = vmatmul.f32.gmra.mxu0 %v142
    %v270 = vpop.f32.mrf.mxu0
    %v271 = vadd.f32 0.0, %v270
    %272 = vmatmul.f32.gmra.mxu0 %v144
    %v273 = vpop.f32.mrf.mxu0
    %v274 = vadd.f32 0.0, %v273
    %275 = vmatmul.f32.gmra.mxu0 %v146
    %v276 = vpop.f32.mrf.mxu0
    %v277 = vadd.f32 0.0, %v276
    %278 = vmatmul.f32.gmra.mxu0 %v148
    %v279 = vpop.f32.mrf.mxu0
    %v280 = vadd.f32 0.0, %v279
    %281 = vmatmul.f32.gmra.mxu0 %v150
    %v282 = vpop.f32.mrf.mxu0
    %v283 = vadd.f32 0.0, %v282
    %284 = vmatmul.f32.gmra.mxu0 %v152
    %v285 = vpop.f32.mrf.mxu0
    %v286 = vadd.f32 0.0, %v285
    %287 = vmatmul.f32.gmra.mxu0 %v154
    %v288 = vpop.f32.mrf.mxu0
    %v289 = vadd.f32 0.0, %v288
    %290 = vmatmul.f32.gmra.mxu0 %v156
    %v291 = vpop.f32.mrf.mxu0
    %v292 = vadd.f32 0.0, %v291
    %293 = vmatmul.f32.gmra.mxu0 %v158
    %v294 = vpop.f32.mrf.mxu0
    %v295 = vadd.f32 0.0, %v294
    %296 = vmatmul.f32.gmra.mxu0 %v160
    %v297 = vpop.f32.mrf.mxu0
    %v298 = vadd.f32 0.0, %v297
    %299 = vmatmul.f32.gmra.mxu0 %v162
    %v300 = vpop.f32.mrf.mxu0
    %v301 = vadd.f32 0.0, %v300
    %302 = vmatmul.f32.gmra.mxu0 %v164
    %v303 = vpop.f32.mrf.mxu0
    %v304 = vadd.f32 0.0, %v303
    %305 = vmatmul.f32.gmra.mxu0 %v166
    %v306 = vpop.f32.mrf.mxu0
    %v307 = vadd.f32 0.0, %v306
    %308 = vmatmul.f32.gmra.mxu0 %v168
    %v309 = vpop.f32.mrf.mxu0
    %v310 = vadd.f32 0.0, %v309
    %311 = vmatmul.f32.gmra.mxu0 %v170
    %v312 = vpop.f32.mrf.mxu0
    %v313 = vadd.f32 0.0, %v312
    %314 = vmatmul.f32.gmra.mxu0 %v172
    %v315 = vpop.f32.mrf.mxu0
    %v316 = vadd.f32 0.0, %v315
    %317 = vmatmul.f32.gmra.mxu0 %v174
    %v318 = vpop.f32.mrf.mxu0
    %v319 = vadd.f32 0.0, %v318
    %320 = vdwg.mxu0
    %321 = vmatpush.msra.mxu0 %v207
    %322 = vmatpush.msra.mxu0 %v206
    %323 = vmatpush.msra.mxu0 %v205
    %324 = vmatpush.msra.mxu0 %v204
    %325 = vmatpush.msra.mxu0 %v203
    %326 = vmatpush.msra.mxu0 %v202
    %327 = vmatpush.msra.mxu0 %v201
    %328 = vmatpush.msra.mxu0 %v200
    %329 = vmatpush.msra.mxu0 %v199
    %330 = vmatpush.msra.mxu0 %v198
    %331 = vmatpush.msra.mxu0 %v197
    %332 = vmatpush.msra.mxu0 %v196
    %333 = vmatpush.msra.mxu0 %v195
    %334 = vmatpush.msra.mxu0 %v194
    %335 = vmatpush.msra.mxu0 %v193
    %336 = vmatpush.msra.mxu0 %v192
    %337 = vmatmul.f32.gmra.mxu0 %v113
    %v338 = vpop.f32.mrf.mxu0
    %v339 = vadd.f32 %v226, %v338
    %340 = vmatmul.f32.gmra.mxu0 %v115
    %v341 = vpop.f32.mrf.mxu0
    %v342 = vadd.f32 %v229, %v341
    %343 = vmatmul.f32.gmra.mxu0 %v117
    %v344 = vpop.f32.mrf.mxu0
    %v345 = vadd.f32 %v232, %v344
    %346 = vmatmul.f32.gmra.mxu0 %v119
    %v347 = vpop.f32.mrf.mxu0
    %v348 = vadd.f32 %v235, %v347
    %349 = vmatmul.f32.gmra.mxu0 %v121
    %v350 = vpop.f32.mrf.mxu0
    %v351 = vadd.f32 %v238, %v350
    %352 = vmatmul.f32.gmra.mxu0 %v123
    %v353 = vpop.f32.mrf.mxu0
    %v354 = vadd.f32 %v241, %v353
    %355 = vmatmul.f32.gmra.mxu0 %v125
    %v356 = vpop.f32.mrf.mxu0
    %v357 = vadd.f32 %v244, %v356
    %358 = vmatmul.f32.gmra.mxu0 %v127
    %v359 = vpop.f32.mrf.mxu0
    %v360 = vadd.f32 %v247, %v359
    %361 = vmatmul.f32.gmra.mxu0 %v129
    %v362 = vpop.f32.mrf.mxu0
    %v363 = vadd.f32 %v250, %v362
    %364 = vmatmul.f32.gmra.mxu0 %v131
    %v365 = vpop.f32.mrf.mxu0
    %v366 = vadd.f32 %v253, %v365
    %367 = vmatmul.f32.gmra.mxu0 %v133
    %v368 = vpop.f32.mrf.mxu0
    %v369 = vadd.f32 %v256, %v368
    %370 = vmatmul.f32.gmra.mxu0 %v135
    %v371 = vpop.f32.mrf.mxu0
    %v372 = vadd.f32 %v259, %v371
    %373 = vmatmul.f32.gmra.mxu0 %v137
    %v374 = vpop.f32.mrf.mxu0
    %v375 = vadd.f32 %v262, %v374
    %376 = vmatmul.f32.gmra.mxu0 %v139
    %v377 = vpop.f32.mrf.mxu0
    %v378 = vadd.f32 %v265, %v377
    %379 = vmatmul.f32.gmra.mxu0 %v141
    %v380 = vpop.f32.mrf.mxu0
    %v381 = vadd.f32 %v268, %v380
    %382 = vmatmul.f32.gmra.mxu0 %v143
    %v383 = vpop.f32.mrf.mxu0
    %v384 = vadd.f32 %v271, %v383
    %385 = vmatmul.f32.gmra.mxu0 %v145
    %v386 = vpop.f32.mrf.mxu0
    %v387 = vadd.f32 %v274, %v386
    %388 = vmatmul.f32.gmra.mxu0 %v147
    %v389 = vpop.f32.mrf.mxu0
    %v390 = vadd.f32 %v277, %v389
    %391 = vmatmul.f32.gmra.mxu0 %v149
    %v392 = vpop.f32.mrf.mxu0
    %v393 = vadd.f32 %v280, %v392
    %394 = vmatmul.f32.gmra.mxu0 %v151
    %v395 = vpop.f32.mrf.mxu0
    %v396 = vadd.f32 %v283, %v395
    %397 = vmatmul.f32.gmra.mxu0 %v153
    %v398 = vpop.f32.mrf.mxu0
    %v399 = vadd.f32 %v286, %v398
    %400 = vmatmul.f32.gmra.mxu0 %v155
    %v401 = vpop.f32.mrf.mxu0
    %v402 = vadd.f32 %v289, %v401
    %403 = vmatmul.f32.gmra.mxu0 %v157
    %v404 = vpop.f32.mrf.mxu0
    %v405 = vadd.f32 %v292, %v404
    %406 = vmatmul.f32.gmra.mxu0 %v159
    %v407 = vpop.f32.mrf.mxu0
    %v408 = vadd.f32 %v295, %v407
    %409 = vmatmul.f32.gmra.mxu0 %v161
    %v410 = vpop.f32.mrf.mxu0
    %v411 = vadd.f32 %v298, %v410
    %412 = vmatmul.f32.gmra.mxu0 %v163
    %v413 = vpop.f32.mrf.mxu0
    %v414 = vadd.f32 %v301, %v413
    %415 = vmatmul.f32.gmra.mxu0 %v165
    %v416 = vpop.f32.mrf.mxu0
    %v417 = vadd.f32 %v304, %v416
    %418 = vmatmul.f32.gmra.mxu0 %v167
    %v419 = vpop.f32.mrf.mxu0
    %v420 = vadd.f32 %v307, %v419
    %421 = vmatmul.f32.gmra.mxu0 %v169
    %v422 = vpop.f32.mrf.mxu0
    %v423 = vadd.f32 %v310, %v422
    %424 = vmatmul.f32.gmra.mxu0 %v171
    %v425 = vpop.f32.mrf.mxu0
    %v426 = vadd.f32 %v313, %v425
    %427 = vmatmul.f32.gmra.mxu0 %v173
    %v428 = vpop.f32.mrf.mxu0
    %v429 = vadd.f32 %v316, %v428
    %430 = vmatmul.f32.gmra.mxu0 %v175
    %v431 = vpop.f32.mrf.mxu0
    %v432 = vadd.f32 %v319, %v431
    %433 = vdwg.mxu0
    %v434 = vadd.f32 %v80, %v339
    %v435 = vadd.f32 %v81, %v342
    %v436 = vadd.f32 %v82, %v345
    %v437 = vadd.f32 %v83, %v348
    %v438 = vadd.f32 %v84, %v351
    %v439 = vadd.f32 %v85, %v354
    %v440 = vadd.f32 %v86, %v357
    %v441 = vadd.f32 %v87, %v360
    %v442 = vadd.f32 %v88, %v363
    %v443 = vadd.f32 %v89, %v366
    %v444 = vadd.f32 %v90, %v369
    %v445 = vadd.f32 %v91, %v372
    %v446 = vadd.f32 %v92, %v375
    %v447 = vadd.f32 %v93, %v378
    %v448 = vadd.f32 %v94, %v381
    %v449 = vadd.f32 %v95, %v384
    %v450 = vadd.f32 %v96, %v387
    %v451 = vadd.f32 %v97, %v390
    %v452 = vadd.f32 %v98, %v393
    %v453 = vadd.f32 %v99, %v396
    %v454 = vadd.f32 %v100, %v399
    %v455 = vadd.f32 %v101, %v402
    %v456 = vadd.f32 %v102, %v405
    %v457 = vadd.f32 %v103, %v408
    %v458 = vadd.f32 %v104, %v411
    %v459 = vadd.f32 %v105, %v414
    %v460 = vadd.f32 %v106, %v417
    %v461 = vadd.f32 %v107, %v420
    %v462 = vadd.f32 %v108, %v423
    %v463 = vadd.f32 %v109, %v426
    %v464 = vadd.f32 %v110, %v429
    %v465 = vadd.f32 %v111, %v432
    %466 = vst [vmem:[#allocation2] sm:$0xff] %v434
    %467 = vst [vmem:[#allocation2 + $0x8] sm:$0xff] %v435
    %468 = vst [vmem:[#allocation2 + $0x10] sm:$0xff] %v436
    %469 = vst [vmem:[#allocation2 + $0x18] sm:$0xff] %v437
    %470 = vst [vmem:[#allocation2 + $0x20] sm:$0xff] %v438
    %471 = vst [vmem:[#allocation2 + $0x28] sm:$0xff] %v439
    %472 = vst [vmem:[#allocation2 + $0x30] sm:$0xff] %v440
    %473 = vst [vmem:[#allocation2 + $0x38] sm:$0xff] %v441
    %474 = vst [vmem:[#allocation2 + $0x40] sm:$0xff] %v442
    %475 = vst [vmem:[#allocation2 + $0x48] sm:$0xff] %v443
    %476 = vst [vmem:[#allocation2 + $0x50] sm:$0xff] %v444
    %477 = vst [vmem:[#allocation2 + $0x58] sm:$0xff] %v445
    %478 = vst [vmem:[#allocation2 + $0x60] sm:$0xff] %v446
    %479 = vst [vmem:[#allocation2 + $0x68] sm:$0xff] %v447
    %480 = vst [vmem:[#allocation2 + $0x70] sm:$0xff] %v448
    %481 = vst [vmem:[#allocation2 + $0x78] sm:$0xff] %v449
    %482 = vst [vmem:[#allocation2 + $0x80] sm:$0xff] %v450
    %483 = vst [vmem:[#allocation2 + $0x88] sm:$0xff] %v451
    %484 = vst [vmem:[#allocation2 + $0x90] sm:$0xff] %v452
    %485 = vst [vmem:[#allocation2 + $0x98] sm:$0xff] %v453
    %486 = vst [vmem:[#allocation2 + $0xa0] sm:$0xff] %v454
    %487 = vst [vmem:[#allocation2 + $0xa8] sm:$0xff] %v455
    %488 = vst [vmem:[#allocation2 + $0xb0] sm:$0xff] %v456
    %489 = vst [vmem:[#allocation2 + $0xb8] sm:$0xff] %v457
    %490 = vst [vmem:[#allocation2 + $0xc0] sm:$0xff] %v458
    %491 = vst [vmem:[#allocation2 + $0xc8] sm:$0xff] %v459
    %492 = vst [vmem:[#allocation2 + $0xd0] sm:$0xff] %v460
    %493 = vst [vmem:[#allocation2 + $0xd8] sm:$0xff] %v461
    %494 = vst [vmem:[#allocation2 + $0xe0] sm:$0xff] %v462
    %495 = vst [vmem:[#allocation2 + $0xe8] sm:$0xff] %v463
    %496 = vst [vmem:[#allocation2 + $0xf0] sm:$0xff] %v464
    %497 = vst [vmem:[#allocation2 + $0xf8] sm:$0xff] %v465
    // Predicated region
    $region22: #{tpu_custom_call.1} parent=1 // pred_check
      %p498 = pneg %p44
    $region23: #{tpu_custom_call.1} parent=1 // pred_check_branch
      %500 = sbr.rel (%p498) target = $region25
    $region24: #{tpu_custom_call.1} parent=1 // pred_region
      %v501 = vld [vmem:[#allocation2] sm:$0xff]
      %v502 = vld [vmem:[#allocation2 + $0x8] sm:$0xff]
      %v503 = vld [vmem:[#allocation2 + $0x10] sm:$0xff]
      %v504 = vld [vmem:[#allocation2 + $0x18] sm:$0xff]
      %v505 = vld [vmem:[#allocation2 + $0x20] sm:$0xff]
      %v506 = vld [vmem:[#allocation2 + $0x28] sm:$0xff]
      %v507 = vld [vmem:[#allocation2 + $0x30] sm:$0xff]
      %v508 = vld [vmem:[#allocation2 + $0x38] sm:$0xff]
      %v509 = vld [vmem:[#allocation2 + $0x40] sm:$0xff]
      %v510 = vld [vmem:[#allocation2 + $0x48] sm:$0xff]
      %v511 = vld [vmem:[#allocation2 + $0x50] sm:$0xff]
      %v512 = vld [vmem:[#allocation2 + $0x58] sm:$0xff]
      %v513 = vld [vmem:[#allocation2 + $0x60] sm:$0xff]
      %v514 = vld [vmem:[#allocation2 + $0x68] sm:$0xff]
      %v515 = vld [vmem:[#allocation2 + $0x70] sm:$0xff]
      %v516 = vld [vmem:[#allocation2 + $0x78] sm:$0xff]
      %v517 = vld [vmem:[#allocation2 + $0x80] sm:$0xff]
      %v518 = vld [vmem:[#allocation2 + $0x88] sm:$0xff]
      %v519 = vld [vmem:[#allocation2 + $0x90] sm:$0xff]
      %v520 = vld [vmem:[#allocation2 + $0x98] sm:$0xff]
      %v521 = vld [vmem:[#allocation2 + $0xa0] sm:$0xff]
      %v522 = vld [vmem:[#allocation2 + $0xa8] sm:$0xff]
      %v523 = vld [vmem:[#allocation2 + $0xb0] sm:$0xff]
      %v524 = vld [vmem:[#allocation2 + $0xb8] sm:$0xff]
      %v525 = vld [vmem:[#allocation2 + $0xc0] sm:$0xff]
      %v526 = vld [vmem:[#allocation2 + $0xc8] sm:$0xff]
      %v527 = vld [vmem:[#allocation2 + $0xd0] sm:$0xff]
      %v528 = vld [vmem:[#allocation2 + $0xd8] sm:$0xff]
      %v529 = vld [vmem:[#allocation2 + $0xe0] sm:$0xff]
      %v530 = vld [vmem:[#allocation2 + $0xe8] sm:$0xff]
      %v531 = vld [vmem:[#allocation2 + $0xf0] sm:$0xff]
      %v532 = vld [vmem:[#allocation2 + $0xf8] sm:$0xff]
      %533 = vst [vmem:[#allocation8] sm:$0xff] %v501
      %534 = vst [vmem:[#allocation8 + $0x8] sm:$0xff] %v502
      %535 = vst [vmem:[#allocation8 + $0x10] sm:$0xff] %v503
      %536 = vst [vmem:[#allocation8 + $0x18] sm:$0xff] %v504
      %537 = vst [vmem:[#allocation8 + $0x20] sm:$0xff] %v505
      %538 = vst [vmem:[#allocation8 + $0x28] sm:$0xff] %v506
      %539 = vst [vmem:[#allocation8 + $0x30] sm:$0xff] %v507
      %540 = vst [vmem:[#allocation8 + $0x38] sm:$0xff] %v508
      %541 = vst [vmem:[#allocation8 + $0x40] sm:$0xff] %v509
      %542 = vst [vmem:[#allocation8 + $0x48] sm:$0xff] %v510
      %543 = vst [vmem:[#allocation8 + $0x50] sm:$0xff] %v511
      %544 = vst [vmem:[#allocation8 + $0x58] sm:$0xff] %v512
      %545 = vst [vmem:[#allocation8 + $0x60] sm:$0xff] %v513
      %546 = vst [vmem:[#allocation8 + $0x68] sm:$0xff] %v514
      %547 = vst [vmem:[#allocation8 + $0x70] sm:$0xff] %v515
      %548 = vst [vmem:[#allocation8 + $0x78] sm:$0xff] %v516
      %549 = vst [vmem:[#allocation8 + $0x80] sm:$0xff] %v517
      %550 = vst [vmem:[#allocation8 + $0x88] sm:$0xff] %v518
      %551 = vst [vmem:[#allocation8 + $0x90] sm:$0xff] %v519
      %552 = vst [vmem:[#allocation8 + $0x98] sm:$0xff] %v520
      %553 = vst [vmem:[#allocation8 + $0xa0] sm:$0xff] %v521
      %554 = vst [vmem:[#allocation8 + $0xa8] sm:$0xff] %v522
      %555 = vst [vmem:[#allocation8 + $0xb0] sm:$0xff] %v523
      %556 = vst [vmem:[#allocation8 + $0xb8] sm:$0xff] %v524
      %557 = vst [vmem:[#allocation8 + $0xc0] sm:$0xff] %v525
      %558 = vst [vmem:[#allocation8 + $0xc8] sm:$0xff] %v526
      %559 = vst [vmem:[#allocation8 + $0xd0] sm:$0xff] %v527
      %560 = vst [vmem:[#allocation8 + $0xd8] sm:$0xff] %v528
      %561 = vst [vmem:[#allocation8 + $0xe0] sm:$0xff] %v529
      %562 = vst [vmem:[#allocation8 + $0xe8] sm:$0xff] %v530
      %563 = vst [vmem:[#allocation8 + $0xf0] sm:$0xff] %v531
      %564 = vst [vmem:[#allocation8 + $0xf8] sm:$0xff] %v532
    $region25: #{tpu_custom_call.1} parent=1 // pred_fallthru
      _
    // Predicated region
    $region26: #{tpu_custom_call.1} parent=1 // pred_check
      _
    $region27: #{tpu_custom_call.1} parent=1 // pred_check_branch
      %566 = sbr.rel (0) target = $region29
    $region28: #{tpu_custom_call.1} parent=1 // pred_region
      %568 = vsyncadd [#allocation5], 0
      %s569 = sshll.u32 [#allocation8], 4
      %s570 = int_to_ptr.vmem [resolvable:$true] %s569
      %s571 = sshll.u32 %s2, 4
      %s572 = int_to_ptr.hbm [resolvable:$true] %s571
      %577 = dma.vmem_to_hbm [thread:$0]  %s570, 4096, %s572, [#allocation5], 128, 128, 8
    $region29: #{tpu_custom_call.1} parent=1 // pred_fallthru
      _
    // Predicated region
    $region30: #{tpu_custom_call.1} parent=1 // pred_check
      _
    $region31: #{tpu_custom_call.1} parent=1 // pred_check_branch
      %579 = sbr.rel (0) target = $region33
    $region32: #{tpu_custom_call.1} parent=1 // pred_region
      %581 = dma.done [#allocation5], 4096
    $region33: #{tpu_custom_call.1} parent=1 // pred_fallthru
      _
    %582 = vsyncpa [#allocation4], 1
    %583 = vsyncpa [#allocation7], 1
    %584 = vsyncpa [#allocation5], 1

</llo_original>
